<compile_context>
chip_gen: v5e
topology: v5e:2x2
jax: 0.10.0
libtpu: 0.0.40
codegen_flags: <defaults>
</compile_context>

<pallas_src>
import math

import jax
import jax.numpy as jnp
from jax.experimental import pallas as pl
from jax.experimental.pallas import tpu as pltpu

B, S, D, DFF, C = 2, 8, 32, 64, 4   # batch, seq, d_model, ffn hidden, n_classes
LANES = 128
OUT_ROWS = 8                        # sublane-full output slab

# ---- merged parameter-slab row offsets (all multiples of 8 except bias rows) ----
R_QKV = 0                  # rows [0,32)    cols [0,96)  : [wq*scale | wk | wv]
R_WO = D                   # rows [32,64)   cols [0,32)  : wo
R_W1 = 2 * D               # rows [64,96)   cols [0,64)  : w1
R_W2 = 3 * D               # rows [96,160)  cols [0,32)  : w2
R_WH = 3 * D + DFF         # rows [160,192) cols [0,4)   : wh (zero padded to 128)
R_B = R_WH + D             # rows [192,208) : bias / layernorm rows
(BR_QKV, BR_BO, BR_B1, BR_B2, BR_G1, BR_BE1, BR_G2, BR_BE2, BR_BH) = range(9)
P_ROWS = R_B + 16          # 208 (multiple of 8)


def transformer_head_kernel(x_ref, p_ref, out_ref):
  x = x_ref[...]                                              # (B, S, D)

  # ---- fused QKV: single flat (B*S, D) x (D, 128) MXU pass ----
  x2 = x.reshape(B * S, D)                                    # tile-aligned flatten
  wqkv = p_ref[R_QKV:R_QKV + D, :]                            # (D, 128), lanes 96:128 zero
  bqkv = p_ref[R_B + BR_QKV:R_B + BR_QKV + 1, :]              # (1, 128)
  qkv = jnp.dot(x2, wqkv, preferred_element_type=jnp.float32) + bqkv
  qkv3 = qkv.reshape(B, S, LANES)                             # tile-aligned split

  # ---- single-head self-attention, CLS query only ----
  q_cls = qkv3[:, 0:1, 0:D]                                   # (B, 1, D); scale pre-folded
  k = qkv3[:, :, D:2 * D]                                     # (B, S, D)
  v = qkv3[:, :, 2 * D:3 * D]                                 # (B, S, D)
  s = jnp.einsum('bqd,bkd->bqk', q_cls, k,
                 preferred_element_type=jnp.float32)          # (B, 1, S)
  s = s - jnp.max(s, axis=-1, keepdims=True)
  p = jnp.exp(s)
  attn = p * pl.reciprocal(jnp.sum(p, axis=-1, keepdims=True), approx=True)
  ctx = jnp.einsum('bqk,bkd->bqd', attn, v,
                   preferred_element_type=jnp.float32)        # (B, 1, D)

  # ---- fingerprint='cls': all post-attention work on token 0 only ----
  ctx_cls = ctx[:, 0, :]                                      # (B, D)
  x_cls = x[:, 0, :]                                          # (B, D)

  wo = p_ref[R_WO:R_WO + D, 0:D]
  bo = p_ref[R_B + BR_BO:R_B + BR_BO + 1, 0:D]
  o = jnp.dot(ctx_cls, wo, preferred_element_type=jnp.float32) + bo

  def layernorm(h, g, be):
    mu = jnp.mean(h, axis=-1, keepdims=True)
    var = jnp.mean(jnp.square(h - mu), axis=-1, keepdims=True)
    return (h - mu) * jax.lax.rsqrt(var + 1e-5) * g + be

  g1 = p_ref[R_B + BR_G1:R_B + BR_G1 + 1, 0:D]
  be1 = p_ref[R_B + BR_BE1:R_B + BR_BE1 + 1, 0:D]
  h = layernorm(x_cls + o, g1, be1)                           # (B, D)

  # ---- feed-forward (CLS row only) ----
  w1 = p_ref[R_W1:R_W1 + D, 0:DFF]
  b1 = p_ref[R_B + BR_B1:R_B + BR_B1 + 1, 0:DFF]
  f = jnp.maximum(jnp.dot(h, w1, preferred_element_type=jnp.float32) + b1, 0.0)
  w2 = p_ref[R_W2:R_W2 + DFF, 0:D]
  b2 = p_ref[R_B + BR_B2:R_B + BR_B2 + 1, 0:D]
  f = jnp.dot(f, w2, preferred_element_type=jnp.float32) + b2

  g2 = p_ref[R_B + BR_G2:R_B + BR_G2 + 1, 0:D]
  be2 = p_ref[R_B + BR_BE2:R_B + BR_BE2 + 1, 0:D]
  h = layernorm(h + f, g2, be2)                               # (B, D)

  # ---- linear head; wh/bh zero-padded to 128 lanes, rows padded to 8 ----
  wh = p_ref[R_WH:R_WH + D, :]                                # (D, 128)
  bh = p_ref[R_B + BR_BH:R_B + BR_BH + 1, :]                  # (1, 128)
  logits = jnp.dot(h, wh, preferred_element_type=jnp.float32) + bh   # (B, 128)
  pad = jnp.zeros((OUT_ROWS - B, LANES), jnp.float32)
  out_ref[...] = jnp.concatenate([logits, pad], axis=0)       # unmasked (8,128) store


def make_params(key):
  """Deterministic nn.Linear-style init (uniform +/- 1/sqrt(fan_in))."""
  ks = jax.random.split(key, 8)

  def lin(k, n_in, n_out):
    bound = 1.0 / math.sqrt(n_in)
    kw, kb = jax.random.split(k)
    w = jax.random.uniform(kw, (n_in, n_out), jnp.float32, -bound, bound)
    b = jax.random.uniform(kb, (1, n_out), jnp.float32, -bound, bound)
    return w, b

  wq, bq = lin(ks[0], D, D)
  wk, bk = lin(ks[1], D, D)
  wv, bv = lin(ks[2], D, D)
  wo, bo = lin(ks[3], D, D)
  w1, b1 = lin(ks[4], D, DFF)
  w2, b2 = lin(ks[5], DFF, D)
  wh, bh = lin(ks[6], D, C)
  g1 = jnp.ones((1, D), jnp.float32)
  be1 = jnp.zeros((1, D), jnp.float32)
  g2 = jnp.ones((1, D), jnp.float32)
  be2 = jnp.zeros((1, D), jnp.float32)
  return (wq, bq, wk, bk, wv, bv, wo, bo,
          g1, be1, w1, b1, w2, b2, g2, be2, wh, bh)


def pack_params(params):
  """Pack the 18 tiny tensors into ONE (208, 128) slab.

  Called once at model-load time (NOT per forward). The 1/sqrt(D) attention
  scale is folded into the q columns/bias here. Lanes past each block's true
  width stay exactly zero (the head's padded lanes rely on this).
  """
  (wq, bq, wk, bk, wv, bv, wo, bo,
   g1, be1, w1, b1, w2, b2, g2, be2, wh, bh) = params
  scale = 1.0 / math.sqrt(D)

  slab = jnp.zeros((P_ROWS, LANES), jnp.float32)
  slab = slab.at[R_QKV:R_QKV + D, 0:3 * D].set(
      jnp.concatenate([wq * scale, wk, wv], axis=1))
  slab = slab.at[R_WO:R_WO + D, 0:D].set(wo)
  slab = slab.at[R_W1:R_W1 + D, 0:DFF].set(w1)
  slab = slab.at[R_W2:R_W2 + DFF, 0:D].set(w2)
  slab = slab.at[R_WH:R_WH + D, 0:C].set(wh)

  slab = slab.at[R_B + BR_QKV, 0:3 * D].set(
      jnp.concatenate([bq * scale, bk, bv], axis=1)[0])
  slab = slab.at[R_B + BR_BO, 0:D].set(bo[0])
  slab = slab.at[R_B + BR_B1, 0:DFF].set(b1[0])
  slab = slab.at[R_B + BR_B2, 0:D].set(b2[0])
  slab = slab.at[R_B + BR_G1, 0:D].set(g1[0])
  slab = slab.at[R_B + BR_BE1, 0:D].set(be1[0])
  slab = slab.at[R_B + BR_G2, 0:D].set(g2[0])
  slab = slab.at[R_B + BR_BE2, 0:D].set(be2[0])
  slab = slab.at[R_B + BR_BH, 0:C].set(bh[0])
  return slab


@jax.jit
def transformer_plus_head(x, p_slab):
  """encode('cls') + linear head forward as one Pallas kernel.

  Two whole-array VMEM operands (activations + one pre-packed parameter slab),
  single grid-less invocation; all matmuls run on the MXU in-kernel.
  For large batches / many graph instances, add grid=(num_batches,) with
  dimension_semantics=("parallel",) so v7x's second TensorCore is used, and
  size batch tiles against v7x's 64 MiB VMEM.
  """
  vmem = pl.BlockSpec(memory_space=pltpu.MemorySpace.VMEM)

  cost = pl.CostEstimate(
      flops=2 * B * S * D * LANES             # fused QKV (full-lane pass)
      + 2 * 2 * B * 1 * S * D                 # CLS scores + ctx
      + 2 * B * D * D                         # wo
      + 2 * 2 * B * D * DFF                   # FFN
      + 2 * B * D * LANES,                    # head (padded)
      transcendentals=B * S + 3 * B,
      bytes_accessed=(B * S * D + P_ROWS * LANES + OUT_ROWS * LANES) * 4,
  )

  out = pl.pallas_call(
      transformer_head_kernel,
      out_shape=jax.ShapeDtypeStruct((OUT_ROWS, LANES), jnp.float32),
      in_specs=[vmem, vmem],
      out_specs=vmem,
      cost_estimate=cost,
  )(x, p_slab)
  return out[:B, :C]


def reference(x, params):
  (wq, bq, wk, bk, wv, bv, wo, bo,
   g1, be1, w1, b1, w2, b2, g2, be2, wh, bh) = params
  q = x @ wq + bq
  k = x @ wk + bk
  v = x @ wv + bv
  s = jnp.einsum('bqd,bkd->bqk', q, k) / math.sqrt(D)
  a = jax.nn.softmax(s, axis=-1)
  o = jnp.einsum('bqk,bkd->bqd', a, v) @ wo + bo

  def ln(h, g, b):
    mu = h.mean(-1, keepdims=True)
    var = ((h - mu) ** 2).mean(-1, keepdims=True)
    return (h - mu) / jnp.sqrt(var + 1e-5) * g + b

  h = ln(x + o, g1, be1)
  f = jnp.maximum(h @ w1 + b1, 0.0) @ w2 + b2
  h = ln(h + f, g2, be2)
  return h[:, 0, :] @ wh + bh


if __name__ == "__main__":
  key = jax.random.PRNGKey(0)
  kx, kp = jax.random.split(key)
  x = jax.random.normal(kx, (B, S, D), jnp.float32)
  params = make_params(kp)

  # Pack once at load time (feedback: never repack per forward).
  p_slab = jax.block_until_ready(pack_params(params))

  out = transformer_plus_head(x, p_slab)
  jax.block_until_ready(out)

  ref = reference(x, params)
  assert out.shape == (B, C), out.shape
  # Tolerance loosened slightly vs. exact-divide version because the softmax
  # denominator uses the EUP approximate reciprocal (pl.reciprocal(approx=True)).
  assert jnp.allclose(out, ref, atol=1e-3, rtol=1e-3), \
      float(jnp.max(jnp.abs(out - ref)))
  print("KERNEL_OK")
</pallas_src>

<mosaic_0001>
module attributes {stable_mosaic.version = 11 : i64} {
  func.func @transformer_head_kernel(%arg0: memref<2x8x32xf32, #tpu.memory_space<vmem>>, %arg1: memref<208x128xf32, #tpu.memory_space<vmem>>, %arg2: memref<8x128xf32, #tpu.memory_space<vmem>>) attributes {dimension_semantics = [], scalar_prefetch = 0 : i64, scratch_operands = 0 : i64, tpu.core_type = #tpu.core_type<tc>} {
    %c0 = arith.constant 0 : index
    %c0_0 = arith.constant 0 : index
    %c0_1 = arith.constant 0 : index
    %0 = vector.load %arg0[%c0, %c0_0, %c0_1] : memref<2x8x32xf32, #tpu.memory_space<vmem>>, vector<2x8x32xf32>
    %1 = vector.shape_cast %0 : vector<2x8x32xf32> to vector<16x32xf32>
    %c0_2 = arith.constant 0 : index
    %c0_3 = arith.constant 0 : index
    %2 = vector.load %arg1[%c0_2, %c0_3] : memref<208x128xf32, #tpu.memory_space<vmem>>, vector<32x128xf32>
    %c192 = arith.constant 192 : index
    %c0_4 = arith.constant 0 : index
    %3 = vector.load %arg1[%c192, %c0_4] : memref<208x128xf32, #tpu.memory_space<vmem>>, vector<1x128xf32>
    %cst = arith.constant dense<0.000000e+00> : vector<16x128xf32>
    %4 = tpu.matmul %1, %2, %cst {dimension_numbers = #tpu.dot_dimension_numbers<[1], [0], [0], [1], [0, 0, 1, 1], [], []>} : vector<16x32xf32>, vector<32x128xf32>, vector<16x128xf32> -> vector<16x128xf32>
    %5 = vector.broadcast %3 : vector<1x128xf32> to vector<16x128xf32>
    %6 = arith.addf %4, %5 : vector<16x128xf32>
    %7 = vector.shape_cast %6 : vector<16x128xf32> to vector<2x8x128xf32>
    %8 = vector.extract_strided_slice %7 {offsets = [0, 0, 0], sizes = [2, 1, 32], strides = [1, 1, 1]} : vector<2x8x128xf32> to vector<2x1x32xf32>
    %9 = vector.extract_strided_slice %7 {offsets = [0, 0, 32], sizes = [2, 8, 32], strides = [1, 1, 1]} : vector<2x8x128xf32> to vector<2x8x32xf32>
    %10 = vector.extract_strided_slice %7 {offsets = [0, 0, 64], sizes = [2, 8, 32], strides = [1, 1, 1]} : vector<2x8x128xf32> to vector<2x8x32xf32>
    "tpu.trace_start"() <{level = 10 : i32, message = "bqd,bkd->bqk"}> : () -> ()
    %cst_5 = arith.constant dense<0.000000e+00> : vector<2x1x8xf32>
    %11 = tpu.matmul %8, %9, %cst_5 {dimension_numbers = #tpu.dot_dimension_numbers<[2], [2], [1], [1], [0, 0, 0, 1, 1, 1], [0], [0]>} : vector<2x1x32xf32>, vector<2x8x32xf32>, vector<2x1x8xf32> -> vector<2x1x8xf32>
    "tpu.trace_stop"() : () -> ()
    %cst_6 = arith.constant dense<0xFF800000> : vector<2x1xf32>
    %12 = vector.multi_reduction <maximumf>, %11, %cst_6 [2] : vector<2x1x8xf32> to vector<2x1xf32>
    %13 = vector.shape_cast %12 : vector<2x1xf32> to vector<2x1x1xf32>
    %14 = vector.broadcast %13 : vector<2x1x1xf32> to vector<2x1x8xf32>
    %15 = arith.subf %11, %14 : vector<2x1x8xf32>
    %16 = math.exp %15 : vector<2x1x8xf32>
    %cst_7 = arith.constant dense<0.000000e+00> : vector<2x1xf32>
    %17 = vector.multi_reduction <add>, %16, %cst_7 [2] : vector<2x1x8xf32> to vector<2x1xf32>
    %18 = vector.shape_cast %17 : vector<2x1xf32> to vector<2x1x1xf32>
    %19 = tpu.reciprocal %18 {approx = true} : vector<2x1x1xf32> -> vector<2x1x1xf32>
    %20 = vector.broadcast %19 : vector<2x1x1xf32> to vector<2x1x8xf32>
    %21 = arith.mulf %16, %20 : vector<2x1x8xf32>
    "tpu.trace_start"() <{level = 10 : i32, message = "bqk,bkd->bqd"}> : () -> ()
    %cst_8 = arith.constant dense<0.000000e+00> : vector<2x1x32xf32>
    %22 = tpu.matmul %21, %10, %cst_8 {dimension_numbers = #tpu.dot_dimension_numbers<[2], [1], [1], [2], [0, 0, 0, 1, 1, 2], [0], [0]>} : vector<2x1x8xf32>, vector<2x8x32xf32>, vector<2x1x32xf32> -> vector<2x1x32xf32>
    "tpu.trace_stop"() : () -> ()
    %23 = vector.shape_cast %22 : vector<2x1x32xf32> to vector<2x32xf32>
    %24 = vector.extract_strided_slice %0 {offsets = [0, 0, 0], sizes = [2, 1, 32], strides = [1, 1, 1]} : vector<2x8x32xf32> to vector<2x1x32xf32>
    %25 = vector.shape_cast %24 : vector<2x1x32xf32> to vector<2x32xf32>
    %c32 = arith.constant 32 : index
    %c0_9 = arith.constant 0 : index
    %26 = vector.load %arg1[%c32, %c0_9] : memref<208x128xf32, #tpu.memory_space<vmem>>, vector<32x32xf32>
    %c193 = arith.constant 193 : index
    %c0_10 = arith.constant 0 : index
    %27 = vector.load %arg1[%c193, %c0_10] : memref<208x128xf32, #tpu.memory_space<vmem>>, vector<1x32xf32>
    %cst_11 = arith.constant dense<0.000000e+00> : vector<2x32xf32>
    %28 = tpu.matmul %23, %26, %cst_11 {dimension_numbers = #tpu.dot_dimension_numbers<[1], [0], [0], [1], [0, 0, 1, 1], [], []>} : vector<2x32xf32>, vector<32x32xf32>, vector<2x32xf32> -> vector<2x32xf32>
    %29 = vector.broadcast %27 : vector<1x32xf32> to vector<2x32xf32>
    %30 = arith.addf %28, %29 : vector<2x32xf32>
    %c196 = arith.constant 196 : index
    %c0_12 = arith.constant 0 : index
    %31 = vector.load %arg1[%c196, %c0_12] : memref<208x128xf32, #tpu.memory_space<vmem>>, vector<1x32xf32>
    %c197 = arith.constant 197 : index
    %c0_13 = arith.constant 0 : index
    %32 = vector.load %arg1[%c197, %c0_13] : memref<208x128xf32, #tpu.memory_space<vmem>>, vector<1x32xf32>
    %33 = arith.addf %25, %30 : vector<2x32xf32>
    %cst_14 = arith.constant dense<0.000000e+00> : vector<2xf32>
    %34 = vector.multi_reduction <add>, %33, %cst_14 [1] : vector<2x32xf32> to vector<2xf32>
    %35 = vector.shape_cast %34 : vector<2xf32> to vector<2x1xf32>
    %cst_15 = arith.constant 3.200000e+01 : f32
    %36 = vector.broadcast %cst_15 : f32 to vector<2x1xf32>
    %37 = arith.divf %35, %36 : vector<2x1xf32>
    %38 = vector.broadcast %37 : vector<2x1xf32> to vector<2x32xf32>
    %39 = arith.subf %33, %38 : vector<2x32xf32>
    %40 = arith.mulf %39, %39 : vector<2x32xf32>
    %cst_16 = arith.constant dense<0.000000e+00> : vector<2xf32>
    %41 = vector.multi_reduction <add>, %40, %cst_16 [1] : vector<2x32xf32> to vector<2xf32>
    %42 = vector.shape_cast %41 : vector<2xf32> to vector<2x1xf32>
    %cst_17 = arith.constant 3.200000e+01 : f32
    %43 = vector.broadcast %cst_17 : f32 to vector<2x1xf32>
    %44 = arith.divf %42, %43 : vector<2x1xf32>
    %45 = vector.broadcast %37 : vector<2x1xf32> to vector<2x32xf32>
    %46 = arith.subf %33, %45 : vector<2x32xf32>
    %cst_18 = arith.constant 9.99999974E-6 : f32
    %47 = vector.broadcast %cst_18 : f32 to vector<2x1xf32>
    %48 = arith.addf %44, %47 : vector<2x1xf32>
    %49 = math.rsqrt %48 : vector<2x1xf32>
    %50 = vector.broadcast %49 : vector<2x1xf32> to vector<2x32xf32>
    %51 = arith.mulf %46, %50 : vector<2x32xf32>
    %52 = vector.broadcast %31 : vector<1x32xf32> to vector<2x32xf32>
    %53 = arith.mulf %51, %52 : vector<2x32xf32>
    %54 = vector.broadcast %32 : vector<1x32xf32> to vector<2x32xf32>
    %55 = arith.addf %53, %54 : vector<2x32xf32>
    %c64 = arith.constant 64 : index
    %c0_19 = arith.constant 0 : index
    %56 = vector.load %arg1[%c64, %c0_19] : memref<208x128xf32, #tpu.memory_space<vmem>>, vector<32x64xf32>
    %c194 = arith.constant 194 : index
    %c0_20 = arith.constant 0 : index
    %57 = vector.load %arg1[%c194, %c0_20] : memref<208x128xf32, #tpu.memory_space<vmem>>, vector<1x64xf32>
    %cst_21 = arith.constant dense<0.000000e+00> : vector<2x64xf32>
    %58 = tpu.matmul %55, %56, %cst_21 {dimension_numbers = #tpu.dot_dimension_numbers<[1], [0], [0], [1], [0, 0, 1, 1], [], []>} : vector<2x32xf32>, vector<32x64xf32>, vector<2x64xf32> -> vector<2x64xf32>
    %59 = vector.broadcast %57 : vector<1x64xf32> to vector<2x64xf32>
    %60 = arith.addf %58, %59 : vector<2x64xf32>
    %cst_22 = arith.constant 0.000000e+00 : f32
    %61 = vector.broadcast %cst_22 : f32 to vector<2x64xf32>
    %62 = arith.maximumf %60, %61 : vector<2x64xf32>
    %c96 = arith.constant 96 : index
    %c0_23 = arith.constant 0 : index
    %63 = vector.load %arg1[%c96, %c0_23] : memref<208x128xf32, #tpu.memory_space<vmem>>, vector<64x32xf32>
    %c195 = arith.constant 195 : index
    %c0_24 = arith.constant 0 : index
    %64 = vector.load %arg1[%c195, %c0_24] : memref<208x128xf32, #tpu.memory_space<vmem>>, vector<1x32xf32>
    %cst_25 = arith.constant dense<0.000000e+00> : vector<2x32xf32>
    %65 = tpu.matmul %62, %63, %cst_25 {dimension_numbers = #tpu.dot_dimension_numbers<[1], [0], [0], [1], [0, 0, 1, 1], [], []>} : vector<2x64xf32>, vector<64x32xf32>, vector<2x32xf32> -> vector<2x32xf32>
    %66 = vector.broadcast %64 : vector<1x32xf32> to vector<2x32xf32>
    %67 = arith.addf %65, %66 : vector<2x32xf32>
    %c198 = arith.constant 198 : index
    %c0_26 = arith.constant 0 : index
    %68 = vector.load %arg1[%c198, %c0_26] : memref<208x128xf32, #tpu.memory_space<vmem>>, vector<1x32xf32>
    %c199 = arith.constant 199 : index
    %c0_27 = arith.constant 0 : index
    %69 = vector.load %arg1[%c199, %c0_27] : memref<208x128xf32, #tpu.memory_space<vmem>>, vector<1x32xf32>
    %70 = arith.addf %55, %67 : vector<2x32xf32>
    %cst_28 = arith.constant dense<0.000000e+00> : vector<2xf32>
    %71 = vector.multi_reduction <add>, %70, %cst_28 [1] : vector<2x32xf32> to vector<2xf32>
    %72 = vector.shape_cast %71 : vector<2xf32> to vector<2x1xf32>
    %cst_29 = arith.constant 3.200000e+01 : f32
    %73 = vector.broadcast %cst_29 : f32 to vector<2x1xf32>
    %74 = arith.divf %72, %73 : vector<2x1xf32>
    %75 = vector.broadcast %74 : vector<2x1xf32> to vector<2x32xf32>
    %76 = arith.subf %70, %75 : vector<2x32xf32>
    %77 = arith.mulf %76, %76 : vector<2x32xf32>
    %cst_30 = arith.constant dense<0.000000e+00> : vector<2xf32>
    %78 = vector.multi_reduction <add>, %77, %cst_30 [1] : vector<2x32xf32> to vector<2xf32>
    %79 = vector.shape_cast %78 : vector<2xf32> to vector<2x1xf32>
    %cst_31 = arith.constant 3.200000e+01 : f32
    %80 = vector.broadcast %cst_31 : f32 to vector<2x1xf32>
    %81 = arith.divf %79, %80 : vector<2x1xf32>
    %82 = vector.broadcast %74 : vector<2x1xf32> to vector<2x32xf32>
    %83 = arith.subf %70, %82 : vector<2x32xf32>
    %cst_32 = arith.constant 9.99999974E-6 : f32
    %84 = vector.broadcast %cst_32 : f32 to vector<2x1xf32>
    %85 = arith.addf %81, %84 : vector<2x1xf32>
    %86 = math.rsqrt %85 : vector<2x1xf32>
    %87 = vector.broadcast %86 : vector<2x1xf32> to vector<2x32xf32>
    %88 = arith.mulf %83, %87 : vector<2x32xf32>
    %89 = vector.broadcast %68 : vector<1x32xf32> to vector<2x32xf32>
    %90 = arith.mulf %88, %89 : vector<2x32xf32>
    %91 = vector.broadcast %69 : vector<1x32xf32> to vector<2x32xf32>
    %92 = arith.addf %90, %91 : vector<2x32xf32>
    %c160 = arith.constant 160 : index
    %c0_33 = arith.constant 0 : index
    %93 = vector.load %arg1[%c160, %c0_33] : memref<208x128xf32, #tpu.memory_space<vmem>>, vector<32x128xf32>
    %c200 = arith.constant 200 : index
    %c0_34 = arith.constant 0 : index
    %94 = vector.load %arg1[%c200, %c0_34] : memref<208x128xf32, #tpu.memory_space<vmem>>, vector<1x128xf32>
    %cst_35 = arith.constant dense<0.000000e+00> : vector<2x128xf32>
    %95 = tpu.matmul %92, %93, %cst_35 {dimension_numbers = #tpu.dot_dimension_numbers<[1], [0], [0], [1], [0, 0, 1, 1], [], []>} : vector<2x32xf32>, vector<32x128xf32>, vector<2x128xf32> -> vector<2x128xf32>
    %96 = vector.broadcast %94 : vector<1x128xf32> to vector<2x128xf32>
    %97 = arith.addf %95, %96 : vector<2x128xf32>
    %cst_36 = arith.constant 0.000000e+00 : f32
    %98 = vector.broadcast %cst_36 : f32 to vector<6x128xf32>
    %99 = tpu.concatenate %97, %98 in 0 : vector<2x128xf32>, vector<6x128xf32> -> vector<8x128xf32>
    %c0_37 = arith.constant 0 : index
    %c0_38 = arith.constant 0 : index
    %100 = vector.load %arg2[%c0_37, %c0_38] : memref<8x128xf32, #tpu.memory_space<vmem>>, vector<8x128xf32>
    tpu.vector_store %arg2[%c0_37, %c0_38], %99 {strides = array<i32>} : memref<8x128xf32, #tpu.memory_space<vmem>>, vector<8x128xf32>,
    return
  }
}

</mosaic_0001>

<llo_original>
// kernel: transformer_plus_head.1
$region0: #{transformer_plus_head.1}
  #allocation0 [shape = 'u32[]', space=smem, size = 0x4, offset = 0x4, fixed_abs, tag = 'smem constant byte address 0x4 - core index']
  #allocation1 [shape = 'u32[72,128]{1,0:T(1,128)}', space=vmem, size = 0x9000, scoped, tag = 'internal scratch']
  %s0 = inlined_call_operand.hbm [shape: f32[2,8,32], index: 0, kind: input, shape index: {}]
  %s1 = inlined_call_operand.hbm [shape: f32[208,128], index: 1, kind: input, shape index: {}]
  %s2 = inlined_call_operand.vmem [shape: f32[8,128], index: 2, kind: output, shape index: {}]
  %s3 = sld [smem:[#allocation0]]
  $region26: #{transformer_plus_head.1} parent=0
    _
  %s5 = ssub.s32 1, %s3
  %s6 = scalar_select 0, %s5, %s3
  $region1: #{transformer_plus_head.1} parent=0
    #allocation2 [shape = 'u8[8192]{0}', space=vmem, size = 0x2000, scoped, tag = 'input window, operand 0, single buffered']
    #allocation3 [shape = 's32[1]{0}', space=sflag, size = 0x4, scoped, tag = 'scoped memory for transformer_plus_head.1']
    #allocation4 [shape = 'u8[106496]{0}', space=vmem, size = 0x1a000, scoped, tag = 'input window, operand 1, single buffered']
    #allocation5 [shape = 's32[1]{0}', space=sflag, size = 0x4, scoped, tag = 'scoped memory for transformer_plus_head.1']
    %7 = vsyncpa [#allocation3], 0
    %8 = vsyncpa [#allocation5], 0
    // Predicated region
    $region2: #{transformer_plus_head.1} parent=1 // pred_check
      _
    $region3: #{transformer_plus_head.1} parent=1 // pred_check_branch
      %10 = sbr.rel (0) target = $region5
    $region4: #{transformer_plus_head.1} parent=1 // pred_region
      %12 = vsyncadd [#allocation3], 0
      %s13 = sshll.u32 %s0, 4
      %s14 = int_to_ptr.hbm [resolvable:$true] %s13
      %s15 = sshll.u32 [#allocation2], 4
      %s16 = int_to_ptr.vmem [resolvable:$true] %s15
      %21 = dma.hbm_to_vmem [thread:$0]  %s14, 256, %s16, [#allocation3], 128, 128, 8
    $region5: #{transformer_plus_head.1} parent=1 // pred_fallthru
      _
    // Predicated region
    $region6: #{transformer_plus_head.1} parent=1 // pred_check
      _
    $region7: #{transformer_plus_head.1} parent=1 // pred_check_branch
      %23 = sbr.rel (0) target = $region9
    $region8: #{transformer_plus_head.1} parent=1 // pred_region
      %25 = vsyncadd [#allocation5], 0
      %s26 = sshll.u32 %s1, 4
      %s27 = int_to_ptr.hbm [resolvable:$true] %s26
      %s28 = sshll.u32 [#allocation4], 4
      %s29 = int_to_ptr.vmem [resolvable:$true] %s28
      %34 = dma.hbm_to_vmem [thread:$0]  %s27, 3328, %s29, [#allocation5], 128, 128, 8
    $region9: #{transformer_plus_head.1} parent=1 // pred_fallthru
      _
    // Predicated region
    $region10: #{transformer_plus_head.1} parent=1 // pred_check
      _
    $region11: #{transformer_plus_head.1} parent=1 // pred_check_branch
      %36 = sbr.rel (0) target = $region13
    $region12: #{transformer_plus_head.1} parent=1 // pred_region
      %38 = dma.done [#allocation3], 256
    $region13: #{transformer_plus_head.1} parent=1 // pred_fallthru
      _
    // Predicated region
    $region14: #{transformer_plus_head.1} parent=1 // pred_check
      _
    $region15: #{transformer_plus_head.1} parent=1 // pred_check_branch
      %40 = sbr.rel (0) target = $region17
    $region16: #{transformer_plus_head.1} parent=1 // pred_region
      %42 = dma.done [#allocation5], 3328
    $region17: #{transformer_plus_head.1} parent=1 // pred_fallthru
      _
    %v43 = vld [vmem:[#allocation2] sm:$0xff]
    %v44 = vld [vmem:[#allocation2 + $0x8] sm:$0xff]
    %v45 = vld [vmem:[#allocation4] sm:$0xff]
    %v46 = vld [vmem:[#allocation4 + $0x8] sm:$0xff]
    %v47 = vld [vmem:[#allocation4 + $0x10] sm:$0xff]
    %v48 = vld [vmem:[#allocation4 + $0x18] sm:$0xff]
    %v49 = vld [vmem:[#allocation4 + $0xc0] sm:$0x1]
    %v50 = vperm.slane %v49, 0
    %vm51 = vcmask 261120
    %v53 = vsel %vm51, %v43, 0
    %v56 = vsel %vm51, %v44, 0
    %58 = vmatpush.msra.mxu0 0.0
    %59 = vmatpush.msra.mxu0 0.0
    %60 = vmatpush.msra.mxu0 0.0
    %61 = vmatpush.msra.mxu0 0.0
    %62 = vmatpush.msra.mxu0 0.0
    %63 = vmatpush.msra.mxu0 0.0
    %64 = vmatpush.msra.mxu0 0.0
    %65 = vmatpush.msra.mxu0 0.0
    %66 = vmatpush.msra.mxu0 0.0
    %67 = vmatpush.msra.mxu0 0.0
    %68 = vmatpush.msra.mxu0 0.0
    %69 = vmatpush.msra.mxu0 0.0
    %70 = vmatpush.msra.mxu0 %v48
    %71 = vmatpush.msra.mxu0 %v47
    %72 = vmatpush.msra.mxu0 %v46
    %73 = vmatpush.msra.mxu0 %v45
    %74 = vmatmul.f32.gmra.mxu0 %v53
    %v75 = vpop.f32.mrf.mxu0
    %v76 = vadd.f32 %v50, %v75
    %77 = vmatmul.f32.gmra.mxu0 %v56
    %v78 = vpop.f32.mrf.mxu0
    %v79 = vadd.f32 %v50, %v78
    %80 = vdwg.mxu0
    %82 = vrot.lane.b32.xlu0 %v76, 96
    %v83 = vpop.permute.xlu0 %82
    %v84 = vsel %vm51, %v76, 0
    %v86 = vsel %vm51, %v83, 0
    %88 = vmatpush.xpose.msra.mxu0 0.0
    %89 = vmatpush.xpose.msra.mxu0 0.0
    %90 = vmatpush.xpose.msra.mxu0 0.0
    %91 = vmatpush.xpose.msra.mxu0 0.0
    %92 = vmatpush.xpose.msra.mxu0 0.0
    %93 = vmatpush.xpose.msra.mxu0 0.0
    %94 = vmatpush.xpose.msra.mxu0 0.0
    %95 = vmatpush.xpose.msra.mxu0 0.0
    %96 = vmatpush.xpose.msra.mxu0 0.0
    %97 = vmatpush.xpose.msra.mxu0 0.0
    %98 = vmatpush.xpose.msra.mxu0 0.0
    %99 = vmatpush.xpose.msra.mxu0 0.0
    %100 = vmatpush.xpose.msra.mxu0 0.0
    %101 = vmatpush.xpose.msra.mxu0 0.0
    %102 = vmatpush.xpose.msra.mxu0 0.0
    %103 = vmatpush.xpose.msra.mxu0 %v86
    %104 = vmatmul.f32.gmra.mxu0 %v84
    %v105 = vpop.f32.mrf.mxu0
    %v106 = vadd.f32 0.0, %v105
    %107 = vdwg.mxu0
    %109 = vrot.lane.b32.xlu0 %v79, 96
    %v110 = vpop.permute.xlu0 %109
    %v111 = vsel %vm51, %v79, 0
    %v113 = vsel %vm51, %v110, 0
    %115 = vmatpush.xpose.msra.mxu0 0.0
    %116 = vmatpush.xpose.msra.mxu0 0.0
    %117 = vmatpush.xpose.msra.mxu0 0.0
    %118 = vmatpush.xpose.msra.mxu0 0.0
    %119 = vmatpush.xpose.msra.mxu0 0.0
    %120 = vmatpush.xpose.msra.mxu0 0.0
    %121 = vmatpush.xpose.msra.mxu0 0.0
    %122 = vmatpush.xpose.msra.mxu0 0.0
    %123 = vmatpush.xpose.msra.mxu0 0.0
    %124 = vmatpush.xpose.msra.mxu0 0.0
    %125 = vmatpush.xpose.msra.mxu0 0.0
    %126 = vmatpush.xpose.msra.mxu0 0.0
    %127 = vmatpush.xpose.msra.mxu0 0.0
    %128 = vmatpush.xpose.msra.mxu0 0.0
    %129 = vmatpush.xpose.msra.mxu0 0.0
    %130 = vmatpush.xpose.msra.mxu0 %v113
    %131 = vmatmul.f32.gmra.mxu0 %v111
    %v132 = vpop.f32.mrf.mxu0
    %v133 = vadd.f32 0.0, %v132
    %134 = vdwg.mxu0
    %vm135 = vcmask 57344
    %v136 = vsel %vm135, %v106, -inf
    %137 = vmax.xlane.f32.xlu0 %v136
    %v138 = vpop.xlane.xlu0 %137
    %v139 = vsel %vm135, %v133, -inf
    %140 = vmax.xlane.f32.xlu0 %v139
    %v141 = vpop.xlane.xlu0 %140
    %v142 = vsub.f32 %v106, %v138
    %v143 = vsub.f32 %v133, %v141
    %v144 = vmul.f32 %v142, 1.442695
    %v145 = vpow.pop %v144
    %v146 = vmul.f32 %v143, 1.442695
    %v147 = vpow.pop %v146
    %v148 = vsel %vm135, %v145, 0.0
    %149 = vadd.xlane.f32.xlu0 %v148
    %v150 = vpop.xlane.xlu0 %149
    %v151 = vsel %vm135, %v147, 0.0
    %152 = vadd.xlane.f32.xlu0 %v151
    %v153 = vpop.xlane.xlu0 %152
    %v154 = vrcp.pop %v150
    %v155 = vrcp.pop %v153
    %v156 = vmul.f32 %v145, %v154
    %v157 = vmul.f32 %v147, %v155
    %158 = vrot.lane.b32.xlu0 %v76, 64
    %v159 = vpop.permute.xlu0 %158
    %vm161 = vcmask 64512
    %v163 = vsel %vm161, %v156, 0
    %165 = vmatpush.msra.mxu0 0.0
    %166 = vmatpush.msra.mxu0 0.0
    %167 = vmatpush.msra.mxu0 0.0
    %168 = vmatpush.msra.mxu0 0.0
    %169 = vmatpush.msra.mxu0 0.0
    %170 = vmatpush.msra.mxu0 0.0
    %171 = vmatpush.msra.mxu0 0.0
    %172 = vmatpush.msra.mxu0 0.0
    %173 = vmatpush.msra.mxu0 0.0
    %174 = vmatpush.msra.mxu0 0.0
    %175 = vmatpush.msra.mxu0 0.0
    %176 = vmatpush.msra.mxu0 0.0
    %177 = vmatpush.msra.mxu0 0.0
    %178 = vmatpush.msra.mxu0 0.0
    %179 = vmatpush.msra.mxu0 0.0
    %180 = vmatpush.msra.mxu0 %v159
    %181 = vmatmul.f32.gmra.mxu0 %v163
    %v182 = vpop.f32.mrf.mxu0
    %v183 = vadd.f32 0.0, %v182
    %184 = vdwg.mxu0
    %185 = vrot.lane.b32.xlu0 %v79, 64
    %v186 = vpop.permute.xlu0 %185
    %v189 = vsel %vm161, %v157, 0
    %191 = vmatpush.msra.mxu0 0.0
    %192 = vmatpush.msra.mxu0 0.0
    %193 = vmatpush.msra.mxu0 0.0
    %194 = vmatpush.msra.mxu0 0.0
    %195 = vmatpush.msra.mxu0 0.0
    %196 = vmatpush.msra.mxu0 0.0
    %197 = vmatpush.msra.mxu0 0.0
    %198 = vmatpush.msra.mxu0 0.0
    %199 = vmatpush.msra.mxu0 0.0
    %200 = vmatpush.msra.mxu0 0.0
    %201 = vmatpush.msra.mxu0 0.0
    %202 = vmatpush.msra.mxu0 0.0
    %203 = vmatpush.msra.mxu0 0.0
    %204 = vmatpush.msra.mxu0 0.0
    %205 = vmatpush.msra.mxu0 0.0
    %206 = vmatpush.msra.mxu0 %v186
    %207 = vmatmul.f32.gmra.mxu0 %v189
    %v208 = vpop.f32.mrf.mxu0
    %v209 = vadd.f32 0.0, %v208
    %210 = vdwg.mxu0
    %v211 = vld [vmem:[#allocation4 + $0x20] sm:$0xff]
    %v212 = vld [vmem:[#allocation4 + $0x28] sm:$0xff]
    %v213 = vld [vmem:[#allocation4 + $0x30] sm:$0xff]
    %v214 = vld [vmem:[#allocation4 + $0x38] sm:$0xff]
    %v215 = vld [vmem:[#allocation4 + $0xc1] sm:$0x1]
    %v216 = vperm.slane %v215, 0
    %v219 = vrot.slane %v209, 7
    %vm220 = vcmask 1041409
    %v221 = vsel %vm220, %v219, %v183
    %v222 = vsel %vm51, %v221, 0
    %224 = vmatpush.msra.mxu0 0.0
    %225 = vmatpush.msra.mxu0 0.0
    %226 = vmatpush.msra.mxu0 0.0
    %227 = vmatpush.msra.mxu0 0.0
    %228 = vmatpush.msra.mxu0 0.0
    %229 = vmatpush.msra.mxu0 0.0
    %230 = vmatpush.msra.mxu0 0.0
    %231 = vmatpush.msra.mxu0 0.0
    %232 = vmatpush.msra.mxu0 0.0
    %233 = vmatpush.msra.mxu0 0.0
    %234 = vmatpush.msra.mxu0 0.0
    %235 = vmatpush.msra.mxu0 0.0
    %236 = vmatpush.msra.mxu0 %v214
    %237 = vmatpush.msra.mxu0 %v213
    %238 = vmatpush.msra.mxu0 %v212
    %239 = vmatpush.msra.mxu0 %v211
    %240 = vmatmul.f32.gmra.mxu0 %v222
    %v241 = vpop.f32.mrf.mxu0
    %v242 = vadd.f32 %v216, %v241
    %243 = vdwg.mxu0
    %v244 = vld [vmem:[#allocation4 + $0xc4] sm:$0x1]
    %v245 = vld [vmem:[#allocation4 + $0xc5] sm:$0x1]
    %v247 = vrot.slane %v242, 1
    %v250 = vadd.f32 %v43, %v242
    %v251 = vadd.f32 %v44, %v247
    %v254 = vrot.slane %v251, 7
    %v255 = vsel %vm220, %v254, %v250
    %vm257 = vcmask 254976
    %v258 = vsel %vm257, %v255, 0.0
    %259 = vadd.xlane.f32.xlu0 %v258
    %v260 = vpop.xlane.xlu0 %259
    %v261 = vrcp.pop 32.0
    %v262 = vmul.f32 32.0, %v261
    %v263 = vsub.f32 1.0, %v262
    %v264 = vmul.f32 %v261, %v263
    %v265 = vadd.f32 %v261, %v264
    %vm266 = vweird.f32 %v261
    %v267 = vsel %vm266, %v261, %v265
    %v268 = vmul.f32 %v260, %v267
    %v270 = vrot.slane %v268, 1
    %v273 = vsub.f32 %v250, %v268
    %v274 = vsub.f32 %v251, %v270
    %v275 = vmul.f32 %v273, %v273
    %v276 = vmul.f32 %v274, %v274
    %v279 = vrot.slane %v276, 7
    %v280 = vsel %vm220, %v279, %v275
    %v282 = vsel %vm257, %v280, 0.0
    %283 = vadd.xlane.f32.xlu0 %v282
    %v284 = vpop.xlane.xlu0 %283
    %v285 = vmul.f32 %v284, %v267
    %v286 = vadd.f32 %v285, 1e-05
    %v287 = vrsqrt.pop %v286
    %v288 = vmul.f32 %v287, %v286
    %v289 = vmul.f32 %v288, %v287
    %v290 = vmul.f32 0.5, %v289
    %v291 = vsub.f32 1.5, %v290
    %v292 = vmul.f32 %v287, %v291
    %vm293 = vweird.f32 %v286
    %vm294 = vweird.f32 %v287
    %vm295 = vmor %vm293, %vm294
    %v296 = vsel %vm295, %v287, %v292
    %v298 = vrot.slane %v296, 1
    %v301 = vmul.f32 %v273, %v296
    %v302 = vmul.f32 %v274, %v298
    %v303 = vperm.slane %v244, 0
    %v304 = vmul.f32 %v301, %v303
    %v305 = vmul.f32 %v302, %v303
    %v306 = vperm.slane %v245, 0
    %v307 = vadd.f32 %v304, %v306
    %v308 = vadd.f32 %v305, %v306
    %v309 = vld [vmem:[#allocation4 + $0x40] sm:$0xff]
    %v310 = vld [vmem:[#allocation4 + $0x48] sm:$0xff]
    %v311 = vld [vmem:[#allocation4 + $0x50] sm:$0xff]
    %v312 = vld [vmem:[#allocation4 + $0x58] sm:$0xff]
    %v313 = vld [vmem:[#allocation4 + $0xc2] sm:$0x1]
    %v314 = vperm.slane %v313, 0
    %v317 = vrot.slane %v308, 7
    %v318 = vsel %vm220, %v317, %v307
    %v319 = vsel %vm51, %v318, 0
    %321 = vmatpush.msra.mxu0 0.0
    %322 = vmatpush.msra.mxu0 0.0
    %323 = vmatpush.msra.mxu0 0.0
    %324 = vmatpush.msra.mxu0 0.0
    %325 = vmatpush.msra.mxu0 0.0
    %326 = vmatpush.msra.mxu0 0.0
    %327 = vmatpush.msra.mxu0 0.0
    %328 = vmatpush.msra.mxu0 0.0
    %329 = vmatpush.msra.mxu0 0.0
    %330 = vmatpush.msra.mxu0 0.0
    %331 = vmatpush.msra.mxu0 0.0
    %332 = vmatpush.msra.mxu0 0.0
    %333 = vmatpush.msra.mxu0 %v312
    %334 = vmatpush.msra.mxu0 %v311
    %335 = vmatpush.msra.mxu0 %v310
    %336 = vmatpush.msra.mxu0 %v309
    %337 = vmatmul.f32.gmra.mxu0 %v319
    %v338 = vpop.f32.mrf.mxu0
    %v339 = vadd.f32 %v314, %v338
    %340 = vdwg.mxu0
    %v341 = vmax.f32 %v339, 0.0
    %v342 = vld [vmem:[#allocation4 + $0x60] sm:$0xff]
    %v343 = vld [vmem:[#allocation4 + $0x68] sm:$0xff]
    %v344 = vld [vmem:[#allocation4 + $0x70] sm:$0xff]
    %v345 = vld [vmem:[#allocation4 + $0x78] sm:$0xff]
    %v346 = vld [vmem:[#allocation4 + $0x80] sm:$0xff]
    %v347 = vld [vmem:[#allocation4 + $0x88] sm:$0xff]
    %v348 = vld [vmem:[#allocation4 + $0x90] sm:$0xff]
    %v349 = vld [vmem:[#allocation4 + $0x98] sm:$0xff]
    %v350 = vld [vmem:[#allocation4 + $0xc3] sm:$0x1]
    %v351 = vperm.slane %v350, 0
    %vm352 = vcmask 523264
    %v354 = vsel %vm352, %v341, 0
    %356 = vmatpush.msra.mxu0 0.0
    %357 = vmatpush.msra.mxu0 0.0
    %358 = vmatpush.msra.mxu0 0.0
    %359 = vmatpush.msra.mxu0 0.0
    %360 = vmatpush.msra.mxu0 0.0
    %361 = vmatpush.msra.mxu0 0.0
    %362 = vmatpush.msra.mxu0 0.0
    %363 = vmatpush.msra.mxu0 0.0
    %364 = vmatpush.msra.mxu0 %v349
    %365 = vmatpush.msra.mxu0 %v348
    %366 = vmatpush.msra.mxu0 %v347
    %367 = vmatpush.msra.mxu0 %v346
    %368 = vmatpush.msra.mxu0 %v345
    %369 = vmatpush.msra.mxu0 %v344
    %370 = vmatpush.msra.mxu0 %v343
    %371 = vmatpush.msra.mxu0 %v342
    %372 = vmatmul.f32.gmra.mxu0 %v354
    %v373 = vpop.f32.mrf.mxu0
    %v374 = vadd.f32 %v351, %v373
    %375 = vdwg.mxu0
    %v376 = vld [vmem:[#allocation4 + $0xc6] sm:$0x1]
    %v377 = vld [vmem:[#allocation4 + $0xc7] sm:$0x1]
    %v379 = vrot.slane %v374, 1
    %v382 = vadd.f32 %v307, %v374
    %v383 = vadd.f32 %v308, %v379
    %v386 = vrot.slane %v383, 7
    %v387 = vsel %vm220, %v386, %v382
    %v389 = vsel %vm257, %v387, 0.0
    %390 = vadd.xlane.f32.xlu0 %v389
    %v391 = vpop.xlane.xlu0 %390
    %v392 = vmul.f32 %v391, %v267
    %v394 = vrot.slane %v392, 1
    %v397 = vsub.f32 %v382, %v392
    %v398 = vsub.f32 %v383, %v394
    %v399 = vmul.f32 %v397, %v397
    %v400 = vmul.f32 %v398, %v398
    %v403 = vrot.slane %v400, 7
    %v404 = vsel %vm220, %v403, %v399
    %v406 = vsel %vm257, %v404, 0.0
    %407 = vadd.xlane.f32.xlu0 %v406
    %v408 = vpop.xlane.xlu0 %407
    %v409 = vmul.f32 %v408, %v267
    %v410 = vadd.f32 %v409, 1e-05
    %v411 = vrsqrt.pop %v410
    %v412 = vmul.f32 %v411, %v410
    %v413 = vmul.f32 %v412, %v411
    %v414 = vmul.f32 0.5, %v413
    %v415 = vsub.f32 1.5, %v414
    %v416 = vmul.f32 %v411, %v415
    %vm417 = vweird.f32 %v410
    %vm418 = vweird.f32 %v411
    %vm419 = vmor %vm417, %vm418
    %v420 = vsel %vm419, %v411, %v416
    %v422 = vrot.slane %v420, 1
    %v425 = vmul.f32 %v397, %v420
    %v426 = vmul.f32 %v398, %v422
    %v427 = vperm.slane %v376, 0
    %v428 = vmul.f32 %v425, %v427
    %v429 = vmul.f32 %v426, %v427
    %v430 = vperm.slane %v377, 0
    %v431 = vadd.f32 %v428, %v430
    %v432 = vadd.f32 %v429, %v430
    %v433 = vld [vmem:[#allocation4 + $0xa0] sm:$0xff]
    %v434 = vld [vmem:[#allocation4 + $0xa8] sm:$0xff]
    %v435 = vld [vmem:[#allocation4 + $0xb0] sm:$0xff]
    %v436 = vld [vmem:[#allocation4 + $0xb8] sm:$0xff]
    %v437 = vld [vmem:[#allocation4 + $0xc8] sm:$0x1]
    %v438 = vperm.slane %v437, 0
    %v441 = vrot.slane %v432, 7
    %v442 = vsel %vm220, %v441, %v431
    %v443 = vsel %vm51, %v442, 0
    %445 = vmatpush.msra.mxu0 0.0
    %446 = vmatpush.msra.mxu0 0.0
    %447 = vmatpush.msra.mxu0 0.0
    %448 = vmatpush.msra.mxu0 0.0
    %449 = vmatpush.msra.mxu0 0.0
    %450 = vmatpush.msra.mxu0 0.0
    %451 = vmatpush.msra.mxu0 0.0
    %452 = vmatpush.msra.mxu0 0.0
    %453 = vmatpush.msra.mxu0 0.0
    %454 = vmatpush.msra.mxu0 0.0
    %455 = vmatpush.msra.mxu0 0.0
    %456 = vmatpush.msra.mxu0 0.0
    %457 = vmatpush.msra.mxu0 %v436
    %458 = vmatpush.msra.mxu0 %v435
    %459 = vmatpush.msra.mxu0 %v434
    %460 = vmatpush.msra.mxu0 %v433
    %461 = vmatmul.f32.gmra.mxu0 %v443
    %v462 = vpop.f32.mrf.mxu0
    %v463 = vadd.f32 %v438, %v462
    %464 = vdwg.mxu0
    %vm465 = vcmask 1041408
    %v466 = vsel %vm465, %v463, 0.0
    %467 = vst [vmem:[%s2] sm:$0xff] %v466
    // Predicated region
    $region18: #{transformer_plus_head.1} parent=1 // pred_check
      _
    $region19: #{transformer_plus_head.1} parent=1 // pred_check_branch
      %469 = sbr.rel (0) target = $region21
    $region20: #{transformer_plus_head.1} parent=1 // pred_region
      _
    $region21: #{transformer_plus_head.1} parent=1 // pred_fallthru
      _
    // Predicated region
    $region22: #{transformer_plus_head.1} parent=1 // pred_check
      _
    $region23: #{transformer_plus_head.1} parent=1 // pred_check_branch
      %471 = sbr.rel (0) target = $region25
    $region24: #{transformer_plus_head.1} parent=1 // pred_region
      _
    $region25: #{transformer_plus_head.1} parent=1 // pred_fallthru
      _
    %472 = vsyncpa [#allocation3], 1
    %473 = vsyncpa [#allocation5], 1

</llo_original>
